<compile_context>
chip_gen: v5e
topology: v5e:2x2
jax: 0.10.0
libtpu: 0.0.40
codegen_flags: <defaults>
</compile_context>

<pallas_src>
import functools

import jax
import jax.numpy as jnp
from jax.experimental import pallas as pl
from jax.experimental.pallas import tpu as pltpu

IGNORE_LABEL = 255


# --------------------------------------------------------------------------
# Hardware-aware helpers
# --------------------------------------------------------------------------
def _tpu_generation():
    """Best-effort TPU generation (7 = v7x, 6 = v6e, 5 = v5e/p, 4 = v4); 0 if unknown."""
    try:
        kind = jax.devices()[0].device_kind.lower()
    except Exception:
        return 0
    if "tpu" not in kind:
        return 0
    for g in (7, 6, 5, 4):
        if ("v%d" % g) in kind or ("tpu%d" % g) in kind:
            return g
    return 0


def _fit_tile_to_vmem(tile, c, pred_itemsize, tgt_itemsize, vmem_limit_bytes):
    """Shrink the lane tile until double-buffered inputs + softmax/one-hot
    temporaries fit comfortably inside the scoped-VMEM budget."""
    budget = int(0.75 * vmem_limit_bytes)
    while tile > 1024:
        inputs = 2 * tile * (c * pred_itemsize + tgt_itemsize)   # double-buffered DMA
        temps = 6 * c * tile * 4                                 # logits/e/p/onehot (f32-equiv)
        if inputs + temps <= budget:
            break
        tile = max(1024, ((tile // 2) // 128) * 128)
    return tile


def _pick_lane_tile(hw, cap, shards):
    """Largest lane tile <= cap (multiple of 128), preferring one that makes
    hw % (shards * tile) == 0 so the in-kernel valid-lane mask is never needed."""
    cap = max(128, (int(cap) // 128) * 128)
    if hw <= cap:
        return hw                       # single tile; block == full dim is allowed
    lo = max(128, cap // 2)             # never trade more than 2x tile size for maskless-ness
    for t in range(cap, lo - 1, -128):
        if hw % (t * shards) == 0:
            return t
    for t in range(cap, lo - 1, -128):
        if hw % t == 0:
            return t
    return cap


# --------------------------------------------------------------------------
# Kernel
# --------------------------------------------------------------------------
def _stats_kernel(pred_ref, tgt_ref, gram_ref, cnt_ref, *, hw, tile, nt_p,
                  need_mask, compute_dtype, sharded):
    """One lane tile of the masked per-class statistics.

    gram_ref accumulates g[i, j] = sum_lanes softmax(pred)[i] * onehot[j]
    (TP on the diagonal, sum(p*mask) on the row sums); cnt_ref accumulates the
    exact per-class voxel counts n_c.  Both stay resident in VMEM across the
    whole (per-shard) grid and are written back to HBM once.
    """
    if sharded:
        b = pl.program_id(1)
        j = pl.program_id(2)
        tile_idx = pl.program_id(0) * nt_p + j
    else:
        b = pl.program_id(0)
        j = pl.program_id(1)
        tile_idx = j

    @pl.when((b == 0) & (j == 0))
    def _():
        gram_ref[...] = jnp.zeros_like(gram_ref)
        cnt_ref[...] = jnp.zeros_like(cnt_ref)

    logits = pred_ref[...].astype(compute_dtype)          # (C, TN), native -> compute dtype
    tgt = tgt_ref[...].astype(jnp.int32)                   # (1, TN), narrow int -> i32 on VPU

    if need_mask:
        # Lanes past the real end of the voxel axis (ragged last tile, or a
        # clamped fully-OOB shard-tail tile) must contribute nothing.
        goff = tile_idx * tile
        lane = jax.lax.broadcasted_iota(jnp.int32, tgt.shape, 1)
        valid = (lane + goff) < hw
        tgt = jnp.where(valid, tgt, IGNORE_LABEL)           # kills the one-hot on OOB lanes
        logits = jnp.where(valid, logits, 0)                # keeps softmax finite on OOB garbage

    # Softmax over the class (sublane) axis.
    m = jnp.max(logits, axis=0, keepdims=True)
    e = jnp.exp(logits - m)
    s = jnp.sum(e, axis=0, keepdims=True)
    inv = pl.reciprocal(s.astype(jnp.float32), approx=True)   # EUP vrcp (free slot)
    p = e * inv.astype(compute_dtype)                          # (C, TN)

    c_dim, tn = p.shape
    cls = jax.lax.broadcasted_iota(jnp.int32, (c_dim, tn), 0)
    onehot = (cls == tgt).astype(jnp.bfloat16)              # exact 0/1; 255 never matches a class
    lhs = p.astype(jnp.bfloat16)
    ones = jnp.ones((1, tn), jnp.bfloat16)

    # Lane-axis contraction on the MXU (bf16 in, f32 accumulate).
    dn = (((1,), (1,)), ((), ()))
    g = jax.lax.dot_general(lhs, onehot, dn,
                            preferred_element_type=jnp.float32)      # (C, C)
    c = jax.lax.dot_general(ones, onehot, dn,
                            preferred_element_type=jnp.float32)      # (1, C) exact counts

    gram_ref[...] += g.reshape(gram_ref.shape)
    cnt_ref[...] += c.reshape(cnt_ref.shape)


# --------------------------------------------------------------------------
# Wrapper
# --------------------------------------------------------------------------
def compute_stats_pallas(pred, ssc_target, *, tile_n=32768, num_shards=None,
                         core_parallel=None, softmax_in_bf16=None,
                         vmem_limit_bytes=None):
    """pred: (B, C, H, W) float; ssc_target: (B, H, W) integer (255 = ignore).

    Returns per-class stats (C, 4) float32:
      [:, 0] = TP, [:, 1] = sum(p * mask), [:, 2] = n_c, [:, 3] = N_mask.
    """
    B, C, H, W = pred.shape
    HW = H * W
    gen = _tpu_generation()

    if num_shards is None:
        num_shards = 2 if gen >= 7 else 1                    # only v7x has 2 TensorCores
    if softmax_in_bf16 is None:
        softmax_in_bf16 = (pred.dtype == jnp.bfloat16) and gen >= 6   # never on v5e
    if vmem_limit_bytes is None:
        vmem_limit_bytes = (48 if gen in (0, 7) else 64) << 20        # v7x: 64 MiB physical

    compute_dtype = jnp.bfloat16 if softmax_in_bf16 else jnp.float32

    pred3 = pred.reshape(B, C, HW)                            # free reshape, native dtype
    tgt = ssc_target
    if (not jnp.issubdtype(tgt.dtype, jnp.integer)) or tgt.dtype.itemsize > 4:
        tgt = tgt.astype(jnp.int32)
    tgt3 = tgt.reshape(B, 1, HW)                              # narrow dtype rides to the kernel

    # Lane tile: as big as the VMEM budget allows, preferring no ragged edge.
    cap = _fit_tile_to_vmem(max(128, (int(tile_n) // 128) * 128), C,
                            jnp.dtype(pred.dtype).itemsize,
                            jnp.dtype(tgt.dtype).itemsize,
                            vmem_limit_bytes)
    P = max(1, int(num_shards))
    tile = _pick_lane_tile(HW, cap, P)
    nt = -(-HW // tile)
    P = max(1, min(P, nt))
    nt_p = -(-nt // P)
    clamp = (P * nt_p != nt)
    need_mask = (HW % tile != 0) or clamp
    sharded = P > 1

    if core_parallel is None:
        core_parallel = sharded and gen >= 7

    if sharded:
        if clamp:
            def col(p, j):                                    # clamp fully-OOB shard-tail tiles
                return jnp.minimum(p * nt_p + j, nt - 1)
        else:
            def col(p, j):
                return p * nt_p + j
        in_specs = [
            pl.BlockSpec((pl.Squeezed(), C, tile), lambda p, b, j: (b, 0, col(p, j))),
            pl.BlockSpec((pl.Squeezed(), 1, tile), lambda p, b, j: (b, 0, col(p, j))),
        ]
        out_specs = [
            pl.BlockSpec((1, C, C), lambda p, b, j: (p, 0, 0)),
            pl.BlockSpec((1, 1, C), lambda p, b, j: (p, 0, 0)),
        ]
        out_shape = (jax.ShapeDtypeStruct((P, C, C), jnp.float32),
                     jax.ShapeDtypeStruct((P, 1, C), jnp.float32))
        grid = (P, B, nt_p)
        lead = pltpu.CORE_PARALLEL if core_parallel else pltpu.PARALLEL
        dim_sem = (lead, pltpu.ARBITRARY, pltpu.ARBITRARY)
    else:
        in_specs = [
            pl.BlockSpec((pl.Squeezed(), C, tile), lambda b, j: (b, 0, j)),
            pl.BlockSpec((pl.Squeezed(), 1, tile), lambda b, j: (b, 0, j)),
        ]
        out_specs = [
            pl.BlockSpec((C, C), lambda b, j: (0, 0)),
            pl.BlockSpec((1, C), lambda b, j: (0, 0)),
        ]
        out_shape = (jax.ShapeDtypeStruct((C, C), jnp.float32),
                     jax.ShapeDtypeStruct((1, C), jnp.float32))
        grid = (B, nt)
        dim_sem = (pltpu.ARBITRARY, pltpu.ARBITRARY)

    kernel = functools.partial(_stats_kernel, hw=HW, tile=tile, nt_p=nt_p,
                               need_mask=need_mask, compute_dtype=compute_dtype,
                               sharded=sharded)

    gram, cnt = pl.pallas_call(
        kernel,
        out_shape=out_shape,
        grid_spec=pltpu.PrefetchScalarGridSpec(
            num_scalar_prefetch=0,
            grid=grid,
            in_specs=in_specs,
            out_specs=out_specs,
        ),
        compiler_params=pltpu.CompilerParams(
            dimension_semantics=dim_sem,
            vmem_limit_bytes=int(vmem_limit_bytes)),
    )(pred3, tgt3)

    if sharded:
        gram = jnp.sum(gram, axis=0)                          # (C, C)
        cnt = jnp.sum(cnt, axis=0)                            # (1, C)

    # Deferred finalization on the tiny (C, C) result (pure JAX, negligible).
    tp = jnp.diagonal(gram)                                   # (C,)
    sp = jnp.sum(gram, axis=1)                                # (C,) = sum(p * mask) per class
    nc = cnt.reshape(C)                                       # exact per-class counts
    nm = jnp.sum(nc)
    return jnp.stack([tp, sp, nc, jnp.broadcast_to(nm, (C,))], axis=1)


# --------------------------------------------------------------------------
# Loss tail (tiny per-class math, pure JAX)
# --------------------------------------------------------------------------
def _bce_against_one(x):
    # F.binary_cross_entropy(x, ones) == -log(x); PyTorch clamps the log at -100.
    return jnp.minimum(-jnp.log(jnp.maximum(x, 1e-45)), 100.0)


def _adaptive_loss_tail(stats, f1_buf, beta, alpha, weight_per_class):
    tp = stats[:, 0]
    sum_p = stats[:, 1]
    n_c = stats[:, 2]
    n_mask = stats[0, 3]

    # Specificity numerator recovered algebraically (no extra kernel work):
    # sum((1-p)(1-onehot)mask) = N_mask - sum(p*mask) - n_c + TP
    spec_num = n_mask - sum_p - n_c + tp
    spec_den = n_mask - n_c

    has_class = n_c > 0
    count = jnp.sum(has_class.astype(jnp.float32))

    precision = jnp.where(sum_p > 0, tp / jnp.where(sum_p > 0, sum_p, 1.0), 0.0)
    recall = jnp.where(has_class, tp / jnp.where(has_class, n_c, 1.0), 0.0)
    specificity = jnp.where(spec_den > 0,
                            spec_num / jnp.where(spec_den > 0, spec_den, 1.0), 0.0)
    # Clamp into [0, 1]: guards the log against tiny negatives from the
    # algebraic cancellation / bf16 rounding (torch BCE requires [0, 1]).
    precision = jnp.clip(precision, 0.0, 1.0)
    recall = jnp.clip(recall, 0.0, 1.0)
    specificity = jnp.clip(specificity, 0.0, 1.0)

    loss_prec = jnp.where(has_class & (sum_p > 0), _bce_against_one(precision), 0.0)
    loss_rec = jnp.where(has_class, _bce_against_one(recall), 0.0)
    loss_spec = jnp.where(has_class & (spec_den > 0), _bce_against_one(specificity), 0.0)
    loss_list = loss_prec + loss_rec + loss_spec

    denom_f1 = precision + recall
    f1 = jnp.where(denom_f1 > 0,
                   2.0 * precision * recall / jnp.where(denom_f1 > 0, denom_f1, 1.0),
                   0.0)
    cur_f1 = jnp.where(has_class, f1, 0.0)
    new_f1_buf = beta * f1_buf + (1.0 - beta) * cur_f1

    present = loss_list != 0
    weight_pool = weight_per_class * count

    # softmax(alpha * (1 - F1)) restricted to the "present" classes
    z = alpha * (1.0 - new_f1_buf)
    z = jnp.where(present, z, -jnp.inf)
    zmax = jnp.max(z)
    ez = jnp.where(present, jnp.exp(z - zmax), 0.0)
    sm = ez / jnp.maximum(jnp.sum(ez), 1e-30)

    loss_list_w = loss_list * (1.0 + weight_pool * sm)
    total = jnp.sum(jnp.where(present, loss_list_w, 0.0))
    denom = jnp.maximum(count, 1.0) * (1.0 + weight_per_class)
    # Degenerate all-ignored input (count == 0) returns 0 instead of NaN.
    loss = jnp.where(count > 0, total / denom, 0.0)
    return loss, new_f1_buf


@functools.partial(jax.jit, static_argnames=("beta", "alpha", "weight_per_class"))
def adaptive_loss(pred, ssc_target, f1_buf, *, beta=0.95, alpha=5.0,
                  weight_per_class=3.0):
    """Functional equivalent of AdaptiveLoss.forward.

    Returns (loss, new_F1_list): the PyTorch module mutates its F1_list buffer
    in place; here the updated buffer is returned explicitly.
    """
    stats = compute_stats_pallas(pred, ssc_target)
    return _adaptive_loss_tail(stats, f1_buf, beta, alpha, weight_per_class)


# --------------------------------------------------------------------------
# Pure-JAX reference (sanity check only)
# --------------------------------------------------------------------------
def _stats_reference_jnp(pred, ssc_target):
    C = pred.shape[1]
    p = jax.nn.softmax(pred.astype(jnp.float32), axis=1)          # (B,C,H,W)
    p = jnp.moveaxis(p, 1, -1).reshape(-1, C).T                   # (C,N)
    tgt = ssc_target.reshape(1, -1).astype(jnp.int32)             # (1,N)
    mask = (tgt != IGNORE_LABEL).astype(jnp.float32)
    onehot = (jnp.arange(C, dtype=jnp.int32)[:, None] == tgt).astype(jnp.float32)
    tp = jnp.sum(p * mask * onehot, axis=1)
    sp = jnp.sum(p * mask, axis=1)
    nc = jnp.sum(onehot * mask, axis=1)
    nm = jnp.sum(mask)
    return jnp.stack([tp, sp, nc, jnp.full((C,), nm)], axis=1)    # (C,4)


if __name__ == "__main__":
    key = jax.random.PRNGKey(0)
    B, C, H, W = 2, 17, 16, 16   # classes_num = 17 (module default)
    k1, k2, k3, k4, k5, k6 = jax.random.split(key, 6)

    pred = jax.random.normal(k1, (B, C, H, W), dtype=jnp.float32)
    tgt = jax.random.randint(k2, (B, H, W), 0, C, dtype=jnp.int32).astype(jnp.uint8)
    ignore = jax.random.bernoulli(k3, 0.1, (B, H, W))
    tgt = jnp.where(ignore, jnp.uint8(IGNORE_LABEL), tgt)   # native narrow target dtype

    # register_buffer F1_list = zeros(classes_num)
    f1_buf = jnp.zeros((C,), jnp.float32)

    loss, new_f1 = adaptive_loss(pred, tgt, f1_buf)
    jax.block_until_ready((loss, new_f1))
    assert jnp.isfinite(loss), "non-finite loss"
    assert bool(jnp.all(jnp.isfinite(new_f1))), "non-finite F1 buffer"

    # Sanity: kernel stats vs pure-JAX stats (bf16 MXU inputs + approx
    # reciprocal => tolerance slightly looser than exact f32).
    stats_k = jax.block_until_ready(compute_stats_pallas(pred, tgt))
    stats_r = _stats_reference_jnp(pred, tgt)
    assert jnp.allclose(stats_k, stats_r, rtol=1e-2, atol=0.1), "stats mismatch"

    # Second check: bf16 pred, ragged voxel count (HW=300), multi-tile --
    # exercises the valid-lane mask and (on v6e/v7x) the bf16 softmax path.
    B2, H2, W2 = 1, 15, 20
    pred2 = jax.random.normal(k4, (B2, C, H2, W2), dtype=jnp.bfloat16)
    tgt2 = jax.random.randint(k5, (B2, H2, W2), 0, C, dtype=jnp.int32)
    ign2 = jax.random.bernoulli(k6, 0.2, (B2, H2, W2))
    tgt2 = jnp.where(ign2, IGNORE_LABEL, tgt2).astype(jnp.int32)

    stats2_k = jax.block_until_ready(
        compute_stats_pallas(pred2, tgt2, tile_n=128, num_shards=1))
    stats2_r = _stats_reference_jnp(pred2, tgt2)
    assert jnp.allclose(stats2_k, stats2_r, rtol=1e-2, atol=0.1), "ragged stats mismatch"

    # Third check: 2-way shard split with a clamped shard-tail tile.  The v7x
    # CORE_PARALLEL path only activates when actually running on v7x;
    # core_parallel=False keeps this check portable to 1-TC chips.
    stats3_k = jax.block_until_ready(
        compute_stats_pallas(pred2, tgt2, tile_n=128, num_shards=2,
                             core_parallel=False))
    assert jnp.allclose(stats3_k, stats2_r, rtol=1e-2, atol=0.1), "sharded stats mismatch"

    print("KERNEL_OK")
</pallas_src>

<mosaic_0001>
module attributes {stable_mosaic.version = 11 : i64} {
  func.func @_stats_kernel(%arg0: i32, %arg1: i32, %arg2: memref<1x17x256xf32, #tpu.memory_space<vmem>>, %arg3: memref<1x1x256xi8, #tpu.memory_space<vmem>>, %arg4: memref<17x17xf32, #tpu.memory_space<vmem>>, %arg5: memref<1x17xf32, #tpu.memory_space<vmem>>) attributes {dimension_semantics = [#tpu.dimension_semantics<arbitrary>, #tpu.dimension_semantics<arbitrary>], iteration_bounds = array<i64: 2, 1>, scalar_prefetch = 0 : i64, scratch_operands = 0 : i64, tpu.core_type = #tpu.core_type<tc>, window_params = [{transform_indices = @transform_0, window_bounds = array<i64: 1, 17, 256>}, {transform_indices = @transform_1, window_bounds = array<i64: 1, 1, 256>}, {pipeline_mode = #tpu.pipeline_mode<synchronous>, transform_indices = @transform_2, window_bounds = array<i64: 17, 17>}, {pipeline_mode = #tpu.pipeline_mode<synchronous>, transform_indices = @transform_3, window_bounds = array<i64: 1, 17>}]} {
    %c0_i32 = arith.constant 0 : i32
    %0 = arith.cmpi eq, %arg0, %c0_i32 : i32
    %c0_i32_0 = arith.constant 0 : i32
    %1 = arith.cmpi eq, %arg1, %c0_i32_0 : i32
    %2 = arith.andi %0, %1 : i1
    %3 = arith.extui %2 : i1 to i32
    %c0_i32_1 = arith.constant 0 : i32
    %4 = arith.cmpi ne, %3, %c0_i32_1 : i32
    scf.if %4 {
      %cst_19 = arith.constant 0.000000e+00 : f32
      %36 = vector.broadcast %cst_19 : f32 to vector<17x17xf32>
      %c0_20 = arith.constant 0 : index
      %c0_21 = arith.constant 0 : index
      %37 = vector.load %arg4[%c0_20, %c0_21] : memref<17x17xf32, #tpu.memory_space<vmem>>, vector<17x17xf32>
      tpu.vector_store %arg4[%c0_20, %c0_21], %36 {strides = array<i32>} : memref<17x17xf32, #tpu.memory_space<vmem>>, vector<17x17xf32>,
      %cst_22 = arith.constant 0.000000e+00 : f32
      %38 = vector.broadcast %cst_22 : f32 to vector<1x17xf32>
      %c0_23 = arith.constant 0 : index
      %c0_24 = arith.constant 0 : index
      %39 = vector.load %arg5[%c0_23, %c0_24] : memref<1x17xf32, #tpu.memory_space<vmem>>, vector<1x17xf32>
      tpu.vector_store %arg5[%c0_23, %c0_24], %38 {strides = array<i32>} : memref<1x17xf32, #tpu.memory_space<vmem>>, vector<1x17xf32>,
    } else {
    }
    %c0 = arith.constant 0 : index
    %c0_2 = arith.constant 0 : index
    %c0_3 = arith.constant 0 : index
    %5 = vector.load %arg2[%c0, %c0_2, %c0_3] : memref<1x17x256xf32, #tpu.memory_space<vmem>>, vector<1x17x256xf32>
    %6 = vector.shape_cast %5 : vector<1x17x256xf32> to vector<17x256xf32>
    %c0_4 = arith.constant 0 : index
    %c0_5 = arith.constant 0 : index
    %c0_6 = arith.constant 0 : index
    %7 = vector.load %arg3[%c0_4, %c0_5, %c0_6] : memref<1x1x256xi8, #tpu.memory_space<vmem>>, vector<1x1x256xi8>
    %8 = vector.shape_cast %7 : vector<1x1x256xi8> to vector<1x256xi8>
    %9 = arith.extui %8 : vector<1x256xi8> to vector<1x256xi32>
    %cst = arith.constant dense<0xFF800000> : vector<256xf32>
    %10 = vector.multi_reduction <maximumf>, %6, %cst [0] : vector<17x256xf32> to vector<256xf32>
    %11 = vector.shape_cast %10 : vector<256xf32> to vector<1x256xf32>
    %12 = vector.broadcast %11 : vector<1x256xf32> to vector<17x256xf32>
    %13 = arith.subf %6, %12 : vector<17x256xf32>
    %14 = math.exp %13 : vector<17x256xf32>
    %cst_7 = arith.constant dense<0.000000e+00> : vector<256xf32>
    %15 = vector.multi_reduction <add>, %14, %cst_7 [0] : vector<17x256xf32> to vector<256xf32>
    %16 = vector.shape_cast %15 : vector<256xf32> to vector<1x256xf32>
    %17 = tpu.reciprocal %16 {approx = true} : vector<1x256xf32> -> vector<1x256xf32>
    %18 = vector.broadcast %17 : vector<1x256xf32> to vector<17x256xf32>
    %19 = arith.mulf %14, %18 : vector<17x256xf32>
    %20 = tpu.iota {dimensions = array<i32: 0>} : vector<17x256xi32>
    %21 = vector.broadcast %9 : vector<1x256xi32> to vector<17x256xi32>
    %22 = arith.cmpi eq, %20, %21 : vector<17x256xi32>
    %23 = arith.extui %22 : vector<17x256xi1> to vector<17x256xi32>
    %24 = arith.sitofp %23 : vector<17x256xi32> to vector<17x256xf32>
    %25 = arith.truncf %24 : vector<17x256xf32> to vector<17x256xbf16>
    %26 = arith.truncf %19 : vector<17x256xf32> to vector<17x256xbf16>
    %cst_8 = arith.constant 1.000000e+00 : bf16
    %27 = vector.broadcast %cst_8 : bf16 to vector<1x256xbf16>
    %cst_9 = arith.constant dense<0.000000e+00> : vector<17x17xf32>
    %28 = tpu.matmul %26, %25, %cst_9 {dimension_numbers = #tpu.dot_dimension_numbers<[1], [1], [0], [0], [0, 0, 1, 0], [], []>} : vector<17x256xbf16>, vector<17x256xbf16>, vector<17x17xf32> -> vector<17x17xf32>
    %cst_10 = arith.constant dense<0.000000e+00> : vector<1x17xf32>
    %29 = tpu.matmul %27, %25, %cst_10 {dimension_numbers = #tpu.dot_dimension_numbers<[1], [1], [0], [0], [0, 0, 1, 0], [], []>} : vector<1x256xbf16>, vector<17x256xbf16>, vector<1x17xf32> -> vector<1x17xf32>
    %c0_11 = arith.constant 0 : index
    %c0_12 = arith.constant 0 : index
    %30 = vector.load %arg4[%c0_11, %c0_12] : memref<17x17xf32, #tpu.memory_space<vmem>>, vector<17x17xf32>
    %31 = arith.addf %30, %28 : vector<17x17xf32>
    %c0_13 = arith.constant 0 : index
    %c0_14 = arith.constant 0 : index
    %32 = vector.load %arg4[%c0_13, %c0_14] : memref<17x17xf32, #tpu.memory_space<vmem>>, vector<17x17xf32>
    tpu.vector_store %arg4[%c0_13, %c0_14], %31 {strides = array<i32>} : memref<17x17xf32, #tpu.memory_space<vmem>>, vector<17x17xf32>,
    %c0_15 = arith.constant 0 : index
    %c0_16 = arith.constant 0 : index
    %33 = vector.load %arg5[%c0_15, %c0_16] : memref<1x17xf32, #tpu.memory_space<vmem>>, vector<1x17xf32>
    %34 = arith.addf %33, %29 : vector<1x17xf32>
    %c0_17 = arith.constant 0 : index
    %c0_18 = arith.constant 0 : index
    %35 = vector.load %arg5[%c0_17, %c0_18] : memref<1x17xf32, #tpu.memory_space<vmem>>, vector<1x17xf32>
    tpu.vector_store %arg5[%c0_17, %c0_18], %34 {strides = array<i32>} : memref<1x17xf32, #tpu.memory_space<vmem>>, vector<1x17xf32>,
    return
  }
  func.func @transform_0(%arg0: i32, %arg1: i32) -> (i32, i32, i32) {
    %c0_i32 = arith.constant 0 : i32
    %c0_i32_0 = arith.constant 0 : i32
    return %arg0, %c0_i32, %arg1 : i32, i32, i32
  }
  func.func @transform_1(%arg0: i32, %arg1: i32) -> (i32, i32, i32) {
    %c0_i32 = arith.constant 0 : i32
    %c0_i32_0 = arith.constant 0 : i32
    return %arg0, %c0_i32, %arg1 : i32, i32, i32
  }
  func.func @transform_2(%arg0: i32, %arg1: i32) -> (i32, i32) {
    %c0_i32 = arith.constant 0 : i32
    %c0_i32_0 = arith.constant 0 : i32
    %c0_i32_1 = arith.constant 0 : i32
    return %c0_i32, %c0_i32_0 : i32, i32
  }
  func.func @transform_3(%arg0: i32, %arg1: i32) -> (i32, i32) {
    %c0_i32 = arith.constant 0 : i32
    %c0_i32_0 = arith.constant 0 : i32
    %c0_i32_1 = arith.constant 0 : i32
    return %c0_i32, %c0_i32_0 : i32, i32
  }
}

</mosaic_0001>

<llo_original>
// kernel: adaptive_loss.1
$region0: #{adaptive_loss.1}
  #allocation0 [shape = 'u32[]', space=smem, size = 0x4, offset = 0x4, fixed_abs, tag = 'smem constant byte address 0x4 - core index']
  #allocation1 [shape = 'u32[72,128]{1,0:T(1,128)}', space=vmem, size = 0x9000, scoped, tag = 'internal scratch']
  %s0 = inlined_call_operand.vmem [shape: f32[2,17,256], index: 0, kind: input, shape index: {}]
  %s1 = inlined_call_operand.vmem [shape: u8[2,1,256], index: 1, kind: input, shape index: {}]
  %s2 = inlined_call_operand.vmem [shape: f32[17,17], index: 2, kind: output, shape index: {0}]
  %s3 = inlined_call_operand.vmem [shape: f32[1,17], index: 3, kind: output, shape index: {1}]
  %4 = xla_tuple %s2, %s3
  %s5 = sld [smem:[#allocation0]]
  $region53: #{adaptive_loss.1} parent=0
    _
  %s7 = ssub.s32 1, %s5
  %s8 = scalar_select 0, %s7, %s5
  loop: start=0, step=1, limit=4
  $region2: #{adaptive_loss.1} parent=0 // loop_pre_header
    _
  $region3: #{adaptive_loss.1} parent=0 // loop_header
    %s10 = sphi 0, %s14
    %p11 = scmp.ge.s32.totalorder %s10, 4
    %s17 = sphi 0, %s29
    %s18 = sphi 0, %s25
    %s19 = sphi 0, %s17
    %s20 = sphi 0, %s18
    %s21 = sphi 0, %s19
    %s22 = sphi 0, %s20
    %s34 = sphi 0, %s36
    %s37 = sphi 0, %s34
    %s38 = sphi 0, %s37
    %s54 = sphi 0, %s38
    %s62 = sphi 0, %s64
    %s65 = sphi 0, %s62
    %s66 = sphi 0, %s65
    %s82 = sphi 0, %s66
    %s86 = sphi 0, %s86
    %s88 = sphi 0, %s86
    %s89 = sphi 0, %s88
    %s103 = sphi 0, %s89
    %s107 = sphi 0, %s107
    %s109 = sphi 0, %s107
    %s110 = sphi 0, %s109
    %s124 = sphi 0, %s110
  $region4: #{adaptive_loss.1} parent=0 // loop_header_branch
    %13 = sbr.rel (%p11) target = $region8
  $region5: #{adaptive_loss.1} parent=0 // loop_body
    %s15 = ssub.s32 %s10, 1
    %s16 = ssub.s32 %s10, 2
    %s23 = sadd.s32 1, %s18
    %p24 = scmp.ge.s32.totalorder %s23, 1
    %s25 = scalar_select %p24, 0, %s23
    %s26 = sadd.s32 1, %s17
    %s27 = scalar_select %p24, %s26, %s17
    %p28 = scmp.ge.s32.totalorder %s27, 2
    %s29 = scalar_select %p28, 0, %s27
    %s30 = ssub.s32 %s17, %s29
    %s31 = ssub.s32 %s18, %s25
    %s32 = sor.u32 %s30, %s31
    %p33 = scmp.eq.s32.totalorder %s32, 0
    %s35 = sadd.s32 %s34, 1
    %s36 = scalar_select %p33, %s34, %s35
    %p39 = pneg %p33
    %p40 = scmp.eq.s32.totalorder %s10, 1
    %p41 = por %p39, %p40
    %p42 = scmp.ne.s32.totalorder %s34, %s37
    %p43 = scmp.eq.s32.totalorder %s10, 0
    %p44 = por %p42, %p43
    %p45 = scmp.ne.s32.totalorder %s34, %s37
    %p46 = scmp.eq.s32.totalorder %s15, 1
    %p47 = por %p45, %p46
    %p48 = scmp.ne.s32.totalorder %s37, %s38
    %p49 = scmp.eq.s32.totalorder %s15, 0
    %p50 = por %p48, %p49
    %p51 = scmp.ne.s32.totalorder %s37, %s38
    %p52 = scmp.eq.s32.totalorder %s16, 1
    %p53 = por %p51, %p52
    %p55 = scmp.ne.s32.totalorder %s38, %s54
    %p56 = scmp.eq.s32.totalorder %s16, 0
    %p57 = por %p55, %p56
    %s58 = ssub.s32 %s17, %s29
    %s59 = ssub.s32 %s18, %s25
    %s60 = sor.u32 %s58, %s59
    %p61 = scmp.eq.s32.totalorder %s60, 0
    %s63 = sadd.s32 %s62, 1
    %s64 = scalar_select %p61, %s62, %s63
    %p67 = pneg %p61
    %p68 = scmp.eq.s32.totalorder %s10, 1
    %p69 = por %p67, %p68
    %p70 = scmp.ne.s32.totalorder %s62, %s65
    %p71 = scmp.eq.s32.totalorder %s10, 0
    %p72 = por %p70, %p71
    %p73 = scmp.ne.s32.totalorder %s62, %s65
    %p74 = scmp.eq.s32.totalorder %s15, 1
    %p75 = por %p73, %p74
    %p76 = scmp.ne.s32.totalorder %s65, %s66
    %p77 = scmp.eq.s32.totalorder %s15, 0
    %p78 = por %p76, %p77
    %p79 = scmp.ne.s32.totalorder %s65, %s66
    %p80 = scmp.eq.s32.totalorder %s16, 1
    %p81 = por %p79, %p80
    %p83 = scmp.ne.s32.totalorder %s66, %s82
    %p84 = scmp.eq.s32.totalorder %s16, 0
    %p85 = por %p83, %p84
    %s87 = sadd.s32 %s86, 1
    %p90 = scmp.eq.s32.totalorder %s10, 1
    %p91 = scmp.ne.s32.totalorder %s86, %s88
    %p92 = scmp.eq.s32.totalorder %s10, 0
    %p93 = por %p91, %p92
    %p94 = scmp.ne.s32.totalorder %s86, %s88
    %p95 = scmp.eq.s32.totalorder %s15, 1
    %p96 = por %p94, %p95
    %p97 = scmp.ne.s32.totalorder %s88, %s89
    %p98 = scmp.eq.s32.totalorder %s15, 0
    %p99 = por %p97, %p98
    %p100 = scmp.ne.s32.totalorder %s88, %s89
    %p101 = scmp.eq.s32.totalorder %s16, 1
    %p102 = por %p100, %p101
    %p104 = scmp.ne.s32.totalorder %s89, %s103
    %p105 = scmp.eq.s32.totalorder %s16, 0
    %p106 = por %p104, %p105
    %s108 = sadd.s32 %s107, 1
    %p111 = scmp.eq.s32.totalorder %s10, 1
    %p112 = scmp.ne.s32.totalorder %s107, %s109
    %p113 = scmp.eq.s32.totalorder %s10, 0
    %p114 = por %p112, %p113
    %p115 = scmp.ne.s32.totalorder %s107, %s109
    %p116 = scmp.eq.s32.totalorder %s15, 1
    %p117 = por %p115, %p116
    %p118 = scmp.ne.s32.totalorder %s109, %s110
    %p119 = scmp.eq.s32.totalorder %s15, 0
    %p120 = por %p118, %p119
    %p121 = scmp.ne.s32.totalorder %s109, %s110
    %p122 = scmp.eq.s32.totalorder %s16, 1
    %p123 = por %p121, %p122
    %p125 = scmp.ne.s32.totalorder %s110, %s124
    %p126 = scmp.eq.s32.totalorder %s16, 0
    %p127 = por %p125, %p126
    %p128 = scmp.le.s32.totalorder 1, %s10
    %p129 = scmp.lt.s32.totalorder %s10, 3
    %p130 = pnand %p128, %p129
    %p131 = pneg %p130
    // Predicated region
    $region9: #{adaptive_loss.1} parent=5 // pred_check
      _
    $region10: #{adaptive_loss.1} parent=5 // pred_check_branch
      %133 = sbr.rel (%p130) target = $region12
    $region11: #{adaptive_loss.1} parent=5 // pred_region
      %s134 = ssub.s32 %s10, 1
    $region12: #{adaptive_loss.1} parent=5 // pred_fallthru
      _
    %p135 = scmp.lt.s32.totalorder %s10, 2
    // Predicated region
    $region13: #{adaptive_loss.1} parent=5 // pred_check
      %p136 = pneg %p135
    $region14: #{adaptive_loss.1} parent=5 // pred_check_branch
      %138 = sbr.rel (%p136) target = $region16
    $region15: #{adaptive_loss.1} parent=5 // pred_region
      // Predicated region
      $region17: #{adaptive_loss.1} parent=15 // pred_check
        %p139 = pneg %p44
      $region18: #{adaptive_loss.1} parent=15 // pred_check_branch
        %141 = sbr.rel (%p139) target = $region20
      $region19: #{adaptive_loss.1} parent=15 // pred_region
        %s142 = smul.u32 2, %s18
        %p143 = scmp.lt.s32.totalorder %s17, 1
        %s144 = scalar_select %p143, %s17, 1
        %p145 = scmp.lt.s32.totalorder %s142, 1
        %s146 = scalar_select %p145, %s142, 1
        %s147 = smul.addr %s144, 6
        %s148 = sadd.s32 %s146, %s147
        %s149 = smul.addr %s148, 8
        %s150 = scalar_lea.vmem %s0, %s149
        %s151 = smul.u32 2, %s18
      $region20: #{adaptive_loss.1} parent=15 // pred_fallthru
        _
      // Predicated region
      $region21: #{adaptive_loss.1} parent=15 // pred_check
        %p152 = pneg %p72
      $region22: #{adaptive_loss.1} parent=15 // pred_check_branch
        %154 = sbr.rel (%p152) target = $region24
      $region23: #{adaptive_loss.1} parent=15 // pred_region
        %s155 = smul.u32 2, %s18
        %p156 = scmp.lt.s32.totalorder %s17, 1
        %s157 = scalar_select %p156, %s17, 1
        %p158 = scmp.lt.s32.totalorder %s155, 1
        %s159 = scalar_select %p158, %s155, 1
        %s160 = smul.addr %s157, 2
        %s161 = sadd.s32 %s159, %s160
        %s162 = scalar_lea.vmem %s1, %s161
        %s163 = smul.u32 2, %s18
      $region24: #{adaptive_loss.1} parent=15 // pred_fallthru
        _
    $region16: #{adaptive_loss.1} parent=5 // pred_fallthru
      _
    %p164 = scmp.le.s32.totalorder 1, %s10
    %p165 = scmp.lt.s32.totalorder %s10, 3
    %p166 = pnand %p164, %p165
    %p167 = pneg %p166
    // Predicated region
    $region25: #{adaptive_loss.1} parent=5 // pred_check
      _
    $region26: #{adaptive_loss.1} parent=5 // pred_check_branch
      %169 = sbr.rel (%p166) target = $region28
    $region27: #{adaptive_loss.1} parent=5 // pred_region
      %s170 = ssub.s32 %s10, 1
      %s171 = smul.u32 2, %s20
      %p172 = scmp.lt.s32.totalorder %s19, 1
      %s173 = scalar_select %p172, %s19, 1
      %p174 = scmp.lt.s32.totalorder %s171, 1
      %s175 = scalar_select %p174, %s171, 1
      %s176 = smul.addr %s173, 6
      %s177 = sadd.s32 %s175, %s176
      %s178 = smul.addr %s177, 8
      %s179 = scalar_lea.vmem %s0, %s178
      %p180 = pneg %p50
      %p181 = pneg %p47
      %s182 = smul.u32 2, %s20
      %p183 = scmp.lt.s32.totalorder %s19, 1
      %s184 = scalar_select %p183, %s19, 1
      %p185 = scmp.lt.s32.totalorder %s182, 1
      %s186 = scalar_select %p185, %s182, 1
      %s187 = smul.addr %s184, 2
      %s188 = sadd.s32 %s186, %s187
      %s189 = scalar_lea.vmem %s1, %s188
      %p190 = pneg %p78
      %p191 = pneg %p75
      %p192 = pneg %p99
      %p193 = pneg %p96
      %p194 = pneg %p120
      %p195 = pneg %p117
      %s196 = smul.u32 2, %s20
      %p197 = scmp.lt.s32.totalorder %s19, 1
      %s198 = scalar_select %p197, %s19, 1
      %p199 = scmp.lt.s32.totalorder %s196, 1
      %s200 = scalar_select %p199, %s196, 1
      %s201 = smul.addr %s198, 6
      %s202 = sadd.s32 %s200, %s201
      %s203 = smul.addr %s202, 8
      %s204 = scalar_lea.vmem %s0, %s203
      %s205 = smul.u32 2, %s20
      %s206 = smul.u32 2, %s20
      %p207 = scmp.lt.s32.totalorder %s19, 1
      %s208 = scalar_select %p207, %s19, 1
      %p209 = scmp.lt.s32.totalorder %s206, 1
      %s210 = scalar_select %p209, %s206, 1
      %s211 = smul.addr %s208, 2
      %s212 = sadd.s32 %s210, %s211
      %s213 = scalar_lea.vmem %s1, %s212
      %s214 = smul.u32 2, %s20
      %p217 = scmp.eq.s32.totalorder %s19, 0
      %p218 = scmp.eq.s32.totalorder %s20, 0
      %p219 = pnand %p217, %p218
      %p220 = pneg %p219
      // Predicated region
      $region29: #{adaptive_loss.1} parent=27 // pred_check
        _
      $region30: #{adaptive_loss.1} parent=27 // pred_check_branch
        %222 = sbr.rel (%p219) target = $region32
      $region31: #{adaptive_loss.1} parent=27 // pred_region
        %vm223 = vcmask 138240
        %224 = vst.msk [vmem:[%s2] sm:$0xff] %vm223, 0.0
        %225 = vst.msk [vmem:[%s2 + $0x8] sm:$0xff] %vm223, 0.0
        %vm226 = vcmask 131072
        %227 = vst.msk [vmem:[%s2 + $0x10] sm:$0x1] %vm226, 0.0
        %228 = vst.msk [vmem:[%s3] sm:$0x1] %vm226, 0.0
      $region32: #{adaptive_loss.1} parent=27 // pred_fallthru
        _
      %v229 = vld [vmem:[%s204] sm:$0xff]
      %v230 = vld [vmem:[%s204 + $0x8] sm:$0xff]
      %v231 = vld [vmem:[%s204 + $0x10] sm:$0xff]
      %v232 = vld [vmem:[%s204 + $0x18] sm:$0xff]
      %v233 = vld [vmem:[%s204 + $0x20] sm:$0x1]
      %v234 = vld [vmem:[%s204 + $0x28] sm:$0x1]
      %v235 = vld [vmem:[%s213] sm:$0x3]
      %v236 = vunpack.c.0.s8 %v235
      %v237 = vand.u32 %v236, 255
      %vm238 = vcmask 1040384
      %v239 = vsel %vm238, %v233, -inf
      %v240 = vmax.f32 %v229, %v239
      %v241 = vmax.f32 %v240, %v231
      %v242 = vrot.slane %v241, 4
      %v243 = vmax.f32 %v241, %v242
      %v244 = vrot.slane %v243, 2
      %v245 = vmax.f32 %v243, %v244
      %v246 = vrot.slane %v245, 1
      %v247 = vmax.f32 %v245, %v246
      %v248 = vsel %vm238, %v234, -inf
      %v249 = vmax.f32 %v230, %v248
      %v250 = vmax.f32 %v249, %v232
      %v251 = vrot.slane %v250, 4
      %v252 = vmax.f32 %v250, %v251
      %v253 = vrot.slane %v252, 2
      %v254 = vmax.f32 %v252, %v253
      %v255 = vrot.slane %v254, 1
      %v256 = vmax.f32 %v254, %v255
      %v257 = vsub.f32 %v229, %v247
      %v258 = vsub.f32 %v230, %v256
      %v259 = vsub.f32 %v231, %v247
      %v260 = vsub.f32 %v232, %v256
      %v261 = vsub.f32 %v233, %v247
      %v262 = vsub.f32 %v234, %v256
      %v263 = vmul.f32 %v257, 1.442695
      %v264 = vpow.pop %v263
      %v265 = vmul.f32 %v258, 1.442695
      %v266 = vpow.pop %v265
      %v267 = vmul.f32 %v259, 1.442695
      %v268 = vpow.pop %v267
      %v269 = vmul.f32 %v260, 1.442695
      %v270 = vpow.pop %v269
      %v271 = vmul.f32 %v261, 1.442695
      %v272 = vpow.pop %v271
      %v273 = vmul.f32 %v262, 1.442695
      %v274 = vpow.pop %v273
      %v275 = vadd.f32 %v264, %v268
      %v276 = vsel %vm238, %v272, 0.0
      %v277 = vadd.f32 %v275, %v276
      %v278 = vrot.slane %v277, 4
      %v279 = vadd.f32 %v277, %v278
      %v280 = vrot.slane %v279, 2
      %v281 = vadd.f32 %v279, %v280
      %v282 = vrot.slane %v281, 1
      %v283 = vadd.f32 %v281, %v282
      %v284 = vadd.f32 %v266, %v270
      %v285 = vsel %vm238, %v274, 0.0
      %v286 = vadd.f32 %v284, %v285
      %v287 = vrot.slane %v286, 4
      %v288 = vadd.f32 %v286, %v287
      %v289 = vrot.slane %v288, 2
      %v290 = vadd.f32 %v288, %v289
      %v291 = vrot.slane %v290, 1
      %v292 = vadd.f32 %v290, %v291
      %v293 = vrcp.pop %v283
      %v294 = vrcp.pop %v292
      %v295 = vmul.f32 %v264, %v293
      %v296 = vmul.f32 %v266, %v294
      %v297 = vmul.f32 %v268, %v293
      %v298 = vmul.f32 %v270, %v294
      %v299 = vmul.f32 %v272, %v293
      %v300 = vmul.f32 %v274, %v294
      %v301 = vlaneseq
      %v302 = vshrl.u32 %v301, 7
      %v303 = vadd.s32 %v302, 8
      %v304 = vadd.s32 %v302, 16
      %v305 = vperm.slane %v237, 0
      %v306 = vperm.slane %v237, 4
      %v307 = vperm.slane %v305, 0
      %v308 = vperm.slane %v306, 0
      %vm309 = vcmp.eq.s32.totalorder %v302, %v307
      %vm310 = vcmp.eq.s32.totalorder %v302, %v308
      %vm311 = vcmp.eq.s32.totalorder %v303, %v307
      %vm312 = vcmp.eq.s32.totalorder %v303, %v308
      %vm313 = vcmp.eq.s32.totalorder %v304, %v307
      %vm314 = vcmp.eq.s32.totalorder %v304, %v308
      %v315 = vsel %vm309, 1, 0
      %v316 = vsel %vm310, 1, 0
      %v317 = vsel %vm311, 1, 0
      %v318 = vsel %vm312, 1, 0
      %v319 = vsel %vm313, 1, 0
      %v320 = vsel %vm314, 1, 0
      %v321 = vcvt.s32.f32 %v315
      %v322 = vcvt.s32.f32 %v316
      %v323 = vcvt.s32.f32 %v317
      %v324 = vcvt.s32.f32 %v318
      %v325 = vcvt.s32.f32 %v319
      %v326 = vcvt.s32.f32 %v320
      %v327 = vpack.c.bf16 %v323, %v321
      %v328 = vpack.c.bf16 %v324, %v322
      %v329 = vpack.c.bf16 %v325, %v325
      %v330 = vpack.c.bf16 %v326, %v326
      %v331 = vpack.c.bf16 %v297, %v295
      %v332 = vpack.c.bf16 %v298, %v296
      %v333 = vpack.c.bf16 %v299, %v299
      %v334 = vpack.c.bf16 %v300, %v300
      %335 = vmatpush.bf16.xpose.msra.mxu0 0
      %336 = vmatpush.bf16.xpose.msra.mxu0 0
      %337 = vmatpush.bf16.xpose.msra.mxu0 0
      %338 = vmatpush.bf16.xpose.msra.mxu0 0
      %339 = vmatpush.bf16.xpose.msra.mxu0 0
      %340 = vmatpush.bf16.xpose.msra.mxu0 0
      %341 = vmatpush.bf16.xpose.msra.mxu0 %v329
      %342 = vmatpush.bf16.xpose.msra.mxu0 %v327
      %343 = vmatmul.bf16.gmra.mxu0 %v331
      %v344 = vpop.f32.mrf.mxu0
      %v345 = vadd.f32 0.0, %v344
      %v346 = vpop.f32.mrf.mxu0
      %v347 = vadd.f32 0.0, %v346
      %348 = vmatmul.bf16.gmra.mxu0 %v333
      %v349 = vpop.f32.mrf.mxu0
      %v350 = vadd.f32 0.0, %v349
      %v351 = vpop.f32.mrf.mxu0
      %352 = vdwg.mxu0
      %353 = vmatpush.bf16.xpose.msra.mxu0 0
      %354 = vmatpush.bf16.xpose.msra.mxu0 0
      %355 = vmatpush.bf16.xpose.msra.mxu0 0
      %356 = vmatpush.bf16.xpose.msra.mxu0 0
      %357 = vmatpush.bf16.xpose.msra.mxu0 0
      %358 = vmatpush.bf16.xpose.msra.mxu0 0
      %359 = vmatpush.bf16.xpose.msra.mxu0 %v330
      %360 = vmatpush.bf16.xpose.msra.mxu0 %v328
      %361 = vmatmul.bf16.gmra.mxu0 %v332
      %v362 = vpop.f32.mrf.mxu0
      %v363 = vadd.f32 %v345, %v362
      %v364 = vpop.f32.mrf.mxu0
      %v365 = vadd.f32 %v347, %v364
      %366 = vmatmul.bf16.gmra.mxu0 %v334
      %v367 = vpop.f32.mrf.mxu0
      %v368 = vadd.f32 %v350, %v367
      %v369 = vpop.f32.mrf.mxu0
      %370 = vdwg.mxu0
      %371 = vmatpush.bf16.xpose.msra.mxu0 0
      %372 = vmatpush.bf16.xpose.msra.mxu0 0
      %373 = vmatpush.bf16.xpose.msra.mxu0 0
      %374 = vmatpush.bf16.xpose.msra.mxu0 0
      %375 = vmatpush.bf16.xpose.msra.mxu0 0
      %376 = vmatpush.bf16.xpose.msra.mxu0 0
      %377 = vmatpush.bf16.xpose.msra.mxu0 %v329
      %378 = vmatpush.bf16.xpose.msra.mxu0 %v327
      %379 = vmatmul.bf16.gmra.mxu0 1065369472
      %v380 = vpop.f32.mrf.mxu0
      %v381 = vadd.f32 0.0, %v380
      %v382 = vpop.f32.mrf.mxu0
      %383 = vdwg.mxu0
      %384 = vmatpush.bf16.xpose.msra.mxu0 0
      %385 = vmatpush.bf16.xpose.msra.mxu0 0
      %386 = vmatpush.bf16.xpose.msra.mxu0 0
      %387 = vmatpush.bf16.xpose.msra.mxu0 0
      %388 = vmatpush.bf16.xpose.msra.mxu0 0
      %389 = vmatpush.bf16.xpose.msra.mxu0 0
      %390 = vmatpush.bf16.xpose.msra.mxu0 %v330
      %391 = vmatpush.bf16.xpose.msra.mxu0 %v328
      %392 = vmatmul.bf16.gmra.mxu0 1065369472
      %v393 = vpop.f32.mrf.mxu0
      %v394 = vadd.f32 %v381, %v393
      %v395 = vpop.f32.mrf.mxu0
      %396 = vdwg.mxu0
      %v397 = vld [vmem:[%s2] sm:$0xff]
      %v398 = vld [vmem:[%s2 + $0x8] sm:$0xff]
      %v399 = vld [vmem:[%s2 + $0x10] sm:$0x1]
      %v400 = vadd.f32 %v397, %v363
      %v401 = vadd.f32 %v398, %v365
      %v402 = vadd.f32 %v399, %v368
      %vm403 = vcmask 138240
      %404 = vst.msk [vmem:[%s2] sm:$0xff] %vm403, %v400
      %405 = vst.msk [vmem:[%s2 + $0x8] sm:$0xff] %vm403, %v401
      %vm406 = vcmask 131072
      %407 = vst.msk [vmem:[%s2 + $0x10] sm:$0x1] %vm406, %v402
      %v408 = vld [vmem:[%s3] sm:$0x1]
      %v409 = vadd.f32 %v408, %v394
      %410 = vst.msk [vmem:[%s3] sm:$0x1] %vm406, %v409
      // Predicated region
      $region33: #{adaptive_loss.1} parent=27 // pred_check
        %p411 = pneg %p96
      $region34: #{adaptive_loss.1} parent=27 // pred_check_branch
        %413 = sbr.rel (%p411) target = $region36
      $region35: #{adaptive_loss.1} parent=27 // pred_region
        _
      $region36: #{adaptive_loss.1} parent=27 // pred_fallthru
        _
      // Predicated region
      $region37: #{adaptive_loss.1} parent=27 // pred_check
        %p414 = pneg %p117
      $region38: #{adaptive_loss.1} parent=27 // pred_check_branch
        %416 = sbr.rel (%p414) target = $region40
      $region39: #{adaptive_loss.1} parent=27 // pred_region
        _
      $region40: #{adaptive_loss.1} parent=27 // pred_fallthru
        _
      // Predicated region
      $region41: #{adaptive_loss.1} parent=27 // pred_check
        %p417 = pneg %p96
      $region42: #{adaptive_loss.1} parent=27 // pred_check_branch
        %419 = sbr.rel (%p417) target = $region44
      $region43: #{adaptive_loss.1} parent=27 // pred_region
        _
      $region44: #{adaptive_loss.1} parent=27 // pred_fallthru
        _
      // Predicated region
      $region45: #{adaptive_loss.1} parent=27 // pred_check
        %p420 = pneg %p117
      $region46: #{adaptive_loss.1} parent=27 // pred_check_branch
        %422 = sbr.rel (%p420) target = $region48
      $region47: #{adaptive_loss.1} parent=27 // pred_region
        _
      $region48: #{adaptive_loss.1} parent=27 // pred_fallthru
        _
    $region28: #{adaptive_loss.1} parent=5 // pred_fallthru
      _
    %p423 = scmp.le.s32.totalorder 2, %s10
    // Predicated region
    $region49: #{adaptive_loss.1} parent=5 // pred_check
      %p424 = pneg %p423
    $region50: #{adaptive_loss.1} parent=5 // pred_check_branch
      %426 = sbr.rel (%p424) target = $region52
    $region51: #{adaptive_loss.1} parent=5 // pred_region
      %s427 = ssub.s32 %s10, 2
    $region52: #{adaptive_loss.1} parent=5 // pred_fallthru
      _
  $region6: #{adaptive_loss.1} parent=0 // loop_footer
    %s14 = sadd.s32 1, %s10
  $region7: #{adaptive_loss.1} parent=0 // loop_footer_branch
    %9 = sbr.rel target = $region3
  $region8: #{adaptive_loss.1} parent=0 // loop_exit
    _

</llo_original>
